<compile_context>
chip_gen: v5e
topology: v5e:2x2
jax: 0.10.0
libtpu: 0.0.40
codegen_flags: <defaults>
</compile_context>

<pallas_src>
import functools

import jax
import jax.numpy as jnp
from jax.experimental import pallas as pl
from jax.experimental.pallas import tpu as pltpu

INPUT_DIM = 4
HIDDEN_DIM = 30
NUM_LAYERS = 3   # => 2 hidden->hidden Linear layers after the first one
OUTPUT_DIM = 1

DEFAULT_TM = 512  # batch tile (lane axis); multiple of 128


def _housing_mlp_kernel(x_ref,
                        w0_ref, b0_ref,
                        w1_ref, b1_ref,
                        w2_ref, b2_ref,
                        w3_ref, b3_ref,
                        o_ref):
    """Full forward pass on one batch tile.

    x_ref : (INPUT_DIM, TM)    — batch on the lane axis
    wK    : (out, in)          — PyTorch-native layout
    bK    : (out, 1)           — broadcasts across lanes
    o_ref : (OUTPUT_DIM, TM)   — lane-dense output
    """
    h = x_ref[...]

    # Layer 0: Linear(4, 30) + ReLU    -> (30, TM)
    h = jnp.dot(w0_ref[...], h, preferred_element_type=jnp.float32) + b0_ref[...]
    h = jnp.maximum(h, 0.0)

    # Layer 1: Linear(30, 30) + ReLU   -> (30, TM)
    h = jnp.dot(w1_ref[...], h, preferred_element_type=jnp.float32) + b1_ref[...]
    h = jnp.maximum(h, 0.0)

    # Layer 2: Linear(30, 30) + ReLU   -> (30, TM)
    h = jnp.dot(w2_ref[...], h, preferred_element_type=jnp.float32) + b2_ref[...]
    h = jnp.maximum(h, 0.0)

    # Output layer: Linear(30, 1) + Sigmoid  -> (1, TM)
    z = jnp.dot(w3_ref[...], h, preferred_element_type=jnp.float32) + b3_ref[...]
    o_ref[...] = jax.nn.sigmoid(z)


@functools.partial(jax.jit, static_argnames=("tm",))
def housing_nn_forward(x, params, *, tm=DEFAULT_TM):
    """x: (B, INPUT_DIM) float32. params: list of (W, b), W (out, in), b (out, 1).

    Returns (B, OUTPUT_DIM), matching the PyTorch module's output shape.
    """
    batch = x.shape[0]
    n_tiles = pl.cdiv(batch, tm)
    padded_b = n_tiles * tm

    # Transpose so batch sits on the lane axis; pad batch to a multiple of TM.
    x_t = x.T  # (INPUT_DIM, B)
    if padded_b != batch:
        x_t = jnp.pad(x_t, ((0, 0), (0, padded_b - batch)))

    flat = []
    for w, b in params:
        flat.append(w)
        flat.append(b)

    # Weights/biases: full-extent blocks, constant index map -> resident in
    # VMEM across all grid steps (no per-step re-fetch).
    weight_specs = [
        pl.BlockSpec(p.shape, lambda i: (0, 0)) for p in flat
    ]

    out_padded = pl.pallas_call(
        _housing_mlp_kernel,
        out_shape=jax.ShapeDtypeStruct((OUTPUT_DIM, padded_b), jnp.float32),
        grid=(n_tiles,),
        in_specs=[pl.BlockSpec((INPUT_DIM, tm), lambda i: (0, i))] + weight_specs,
        out_specs=pl.BlockSpec((OUTPUT_DIM, tm), lambda i: (0, i)),
        compiler_params=pltpu.CompilerParams(
            dimension_semantics=("parallel",),
        ),
    )(x_t, *flat)

    # Back to (B, OUTPUT_DIM), dropping the batch padding.
    return out_padded.T[:batch]


def init_params(key):
    """Deterministic init matching PyTorch Linear: W (out, in), b (out, 1)."""
    dims = [INPUT_DIM] + [HIDDEN_DIM] * NUM_LAYERS + [OUTPUT_DIM]
    params = []
    for d_in, d_out in zip(dims[:-1], dims[1:]):
        key, kw, kb = jax.random.split(key, 3)
        bound = 1.0 / jnp.sqrt(d_in)  # PyTorch default U(-1/sqrt(fan_in), ...)
        w = jax.random.uniform(kw, (d_out, d_in), jnp.float32, -bound, bound)
        b = jax.random.uniform(kb, (d_out, 1), jnp.float32, -bound, bound)
        params.append((w, b))
    return params


def reference_forward(x, params):
    """Pure-JAX reference for correctness checking (batch-major layout)."""
    h = x
    for w, b in params[:-1]:
        h = jnp.maximum(h @ w.T + b.T, 0.0)
    w, b = params[-1]
    return jax.nn.sigmoid(h @ w.T + b.T)


if __name__ == "__main__":
    key = jax.random.PRNGKey(0)
    key, kx = jax.random.split(key)

    # columns: latitude, longitude, median_income, average_occupancy
    batch = 1000  # not a multiple of TM -> exercises the padding path
    x = jax.random.normal(kx, (batch, INPUT_DIM), jnp.float32)

    params = init_params(key)

    out = housing_nn_forward(x, params)
    out = jax.block_until_ready(out)

    ref = reference_forward(x, params)
    assert out.shape == (batch, OUTPUT_DIM)
    assert jnp.allclose(out, ref, atol=1e-5, rtol=1e-4), float(
        jnp.max(jnp.abs(out - ref)))

    print("KERNEL_OK")
</pallas_src>

<mosaic_0001>
module attributes {stable_mosaic.version = 11 : i64} {
  func.func @_housing_mlp_kernel(%arg0: i32, %arg1: memref<4x512xf32, #tpu.memory_space<vmem>>, %arg2: memref<30x4xf32, #tpu.memory_space<vmem>>, %arg3: memref<30x1xf32, #tpu.memory_space<vmem>>, %arg4: memref<30x30xf32, #tpu.memory_space<vmem>>, %arg5: memref<30x1xf32, #tpu.memory_space<vmem>>, %arg6: memref<30x30xf32, #tpu.memory_space<vmem>>, %arg7: memref<30x1xf32, #tpu.memory_space<vmem>>, %arg8: memref<1x30xf32, #tpu.memory_space<vmem>>, %arg9: memref<1x1xf32, #tpu.memory_space<vmem>>, %arg10: memref<1x512xf32, #tpu.memory_space<vmem>>) attributes {dimension_semantics = [#tpu.dimension_semantics<parallel>], iteration_bounds = array<i64: 2>, scalar_prefetch = 0 : i64, scratch_operands = 0 : i64, tpu.core_type = #tpu.core_type<tc>, window_params = [{transform_indices = @transform_0, window_bounds = array<i64: 4, 512>}, {pipeline_mode = #tpu.pipeline_mode<synchronous>, transform_indices = @transform_1, window_bounds = array<i64: 30, 4>}, {pipeline_mode = #tpu.pipeline_mode<synchronous>, transform_indices = @transform_2, window_bounds = array<i64: 30, 1>}, {pipeline_mode = #tpu.pipeline_mode<synchronous>, transform_indices = @transform_3, window_bounds = array<i64: 30, 30>}, {pipeline_mode = #tpu.pipeline_mode<synchronous>, transform_indices = @transform_4, window_bounds = array<i64: 30, 1>}, {pipeline_mode = #tpu.pipeline_mode<synchronous>, transform_indices = @transform_5, window_bounds = array<i64: 30, 30>}, {pipeline_mode = #tpu.pipeline_mode<synchronous>, transform_indices = @transform_6, window_bounds = array<i64: 30, 1>}, {pipeline_mode = #tpu.pipeline_mode<synchronous>, transform_indices = @transform_7, window_bounds = array<i64: 1, 30>}, {pipeline_mode = #tpu.pipeline_mode<synchronous>, transform_indices = @transform_8, window_bounds = array<i64: 1, 1>}, {transform_indices = @transform_9, window_bounds = array<i64: 1, 512>}]} {
    %c0 = arith.constant 0 : index
    %c0_0 = arith.constant 0 : index
    %0 = vector.load %arg1[%c0, %c0_0] : memref<4x512xf32, #tpu.memory_space<vmem>>, vector<4x512xf32>
    %c0_1 = arith.constant 0 : index
    %c0_2 = arith.constant 0 : index
    %1 = vector.load %arg2[%c0_1, %c0_2] : memref<30x4xf32, #tpu.memory_space<vmem>>, vector<30x4xf32>
    %cst = arith.constant dense<0.000000e+00> : vector<30x512xf32>
    %2 = tpu.matmul %1, %0, %cst {dimension_numbers = #tpu.dot_dimension_numbers<[1], [0], [0], [1], [0, 0, 1, 1], [], []>} : vector<30x4xf32>, vector<4x512xf32>, vector<30x512xf32> -> vector<30x512xf32>
    %c0_3 = arith.constant 0 : index
    %c0_4 = arith.constant 0 : index
    %3 = vector.load %arg3[%c0_3, %c0_4] : memref<30x1xf32, #tpu.memory_space<vmem>>, vector<30x1xf32>
    %4 = vector.broadcast %3 : vector<30x1xf32> to vector<30x512xf32>
    %5 = arith.addf %2, %4 : vector<30x512xf32>
    %cst_5 = arith.constant 0.000000e+00 : f32
    %6 = vector.broadcast %cst_5 : f32 to vector<30x512xf32>
    %7 = arith.maximumf %5, %6 : vector<30x512xf32>
    %c0_6 = arith.constant 0 : index
    %c0_7 = arith.constant 0 : index
    %8 = vector.load %arg4[%c0_6, %c0_7] : memref<30x30xf32, #tpu.memory_space<vmem>>, vector<30x30xf32>
    %cst_8 = arith.constant dense<0.000000e+00> : vector<30x512xf32>
    %9 = tpu.matmul %8, %7, %cst_8 {dimension_numbers = #tpu.dot_dimension_numbers<[1], [0], [0], [1], [0, 0, 1, 1], [], []>} : vector<30x30xf32>, vector<30x512xf32>, vector<30x512xf32> -> vector<30x512xf32>
    %c0_9 = arith.constant 0 : index
    %c0_10 = arith.constant 0 : index
    %10 = vector.load %arg5[%c0_9, %c0_10] : memref<30x1xf32, #tpu.memory_space<vmem>>, vector<30x1xf32>
    %11 = vector.broadcast %10 : vector<30x1xf32> to vector<30x512xf32>
    %12 = arith.addf %9, %11 : vector<30x512xf32>
    %cst_11 = arith.constant 0.000000e+00 : f32
    %13 = vector.broadcast %cst_11 : f32 to vector<30x512xf32>
    %14 = arith.maximumf %12, %13 : vector<30x512xf32>
    %c0_12 = arith.constant 0 : index
    %c0_13 = arith.constant 0 : index
    %15 = vector.load %arg6[%c0_12, %c0_13] : memref<30x30xf32, #tpu.memory_space<vmem>>, vector<30x30xf32>
    %cst_14 = arith.constant dense<0.000000e+00> : vector<30x512xf32>
    %16 = tpu.matmul %15, %14, %cst_14 {dimension_numbers = #tpu.dot_dimension_numbers<[1], [0], [0], [1], [0, 0, 1, 1], [], []>} : vector<30x30xf32>, vector<30x512xf32>, vector<30x512xf32> -> vector<30x512xf32>
    %c0_15 = arith.constant 0 : index
    %c0_16 = arith.constant 0 : index
    %17 = vector.load %arg7[%c0_15, %c0_16] : memref<30x1xf32, #tpu.memory_space<vmem>>, vector<30x1xf32>
    %18 = vector.broadcast %17 : vector<30x1xf32> to vector<30x512xf32>
    %19 = arith.addf %16, %18 : vector<30x512xf32>
    %cst_17 = arith.constant 0.000000e+00 : f32
    %20 = vector.broadcast %cst_17 : f32 to vector<30x512xf32>
    %21 = arith.maximumf %19, %20 : vector<30x512xf32>
    %c0_18 = arith.constant 0 : index
    %c0_19 = arith.constant 0 : index
    %22 = vector.load %arg8[%c0_18, %c0_19] : memref<1x30xf32, #tpu.memory_space<vmem>>, vector<1x30xf32>
    %cst_20 = arith.constant dense<0.000000e+00> : vector<1x512xf32>
    %23 = tpu.matmul %22, %21, %cst_20 {dimension_numbers = #tpu.dot_dimension_numbers<[1], [0], [0], [1], [0, 0, 1, 1], [], []>} : vector<1x30xf32>, vector<30x512xf32>, vector<1x512xf32> -> vector<1x512xf32>
    %c0_21 = arith.constant 0 : index
    %c0_22 = arith.constant 0 : index
    %24 = vector.load %arg9[%c0_21, %c0_22] : memref<1x1xf32, #tpu.memory_space<vmem>>, vector<1x1xf32>
    %25 = vector.broadcast %24 : vector<1x1xf32> to vector<1x512xf32>
    %26 = arith.addf %23, %25 : vector<1x512xf32>
    %27 = arith.negf %26 : vector<1x512xf32>
    %28 = math.exp %27 : vector<1x512xf32>
    %cst_23 = arith.constant 1.000000e+00 : f32
    %29 = vector.broadcast %cst_23 : f32 to vector<1x512xf32>
    %30 = arith.addf %29, %28 : vector<1x512xf32>
    %31 = arith.divf %29, %30 : vector<1x512xf32>
    %c0_24 = arith.constant 0 : index
    %c0_25 = arith.constant 0 : index
    %32 = vector.load %arg10[%c0_24, %c0_25] : memref<1x512xf32, #tpu.memory_space<vmem>>, vector<1x512xf32>
    tpu.vector_store %arg10[%c0_24, %c0_25], %31 {strides = array<i32>} : memref<1x512xf32, #tpu.memory_space<vmem>>, vector<1x512xf32>,
    return
  }
  func.func @transform_0(%arg0: i32) -> (i32, i32) {
    %c0_i32 = arith.constant 0 : i32
    %c0_i32_0 = arith.constant 0 : i32
    return %c0_i32, %arg0 : i32, i32
  }
  func.func @transform_1(%arg0: i32) -> (i32, i32) {
    %c0_i32 = arith.constant 0 : i32
    %c0_i32_0 = arith.constant 0 : i32
    %c0_i32_1 = arith.constant 0 : i32
    return %c0_i32, %c0_i32_0 : i32, i32
  }
  func.func @transform_2(%arg0: i32) -> (i32, i32) {
    %c0_i32 = arith.constant 0 : i32
    %c0_i32_0 = arith.constant 0 : i32
    %c0_i32_1 = arith.constant 0 : i32
    return %c0_i32, %c0_i32_0 : i32, i32
  }
  func.func @transform_3(%arg0: i32) -> (i32, i32) {
    %c0_i32 = arith.constant 0 : i32
    %c0_i32_0 = arith.constant 0 : i32
    %c0_i32_1 = arith.constant 0 : i32
    return %c0_i32, %c0_i32_0 : i32, i32
  }
  func.func @transform_4(%arg0: i32) -> (i32, i32) {
    %c0_i32 = arith.constant 0 : i32
    %c0_i32_0 = arith.constant 0 : i32
    %c0_i32_1 = arith.constant 0 : i32
    return %c0_i32, %c0_i32_0 : i32, i32
  }
  func.func @transform_5(%arg0: i32) -> (i32, i32) {
    %c0_i32 = arith.constant 0 : i32
    %c0_i32_0 = arith.constant 0 : i32
    %c0_i32_1 = arith.constant 0 : i32
    return %c0_i32, %c0_i32_0 : i32, i32
  }
  func.func @transform_6(%arg0: i32) -> (i32, i32) {
    %c0_i32 = arith.constant 0 : i32
    %c0_i32_0 = arith.constant 0 : i32
    %c0_i32_1 = arith.constant 0 : i32
    return %c0_i32, %c0_i32_0 : i32, i32
  }
  func.func @transform_7(%arg0: i32) -> (i32, i32) {
    %c0_i32 = arith.constant 0 : i32
    %c0_i32_0 = arith.constant 0 : i32
    %c0_i32_1 = arith.constant 0 : i32
    return %c0_i32, %c0_i32_0 : i32, i32
  }
  func.func @transform_8(%arg0: i32) -> (i32, i32) {
    %c0_i32 = arith.constant 0 : i32
    %c0_i32_0 = arith.constant 0 : i32
    %c0_i32_1 = arith.constant 0 : i32
    return %c0_i32, %c0_i32_0 : i32, i32
  }
  func.func @transform_9(%arg0: i32) -> (i32, i32) {
    %c0_i32 = arith.constant 0 : i32
    %c0_i32_0 = arith.constant 0 : i32
    return %c0_i32, %arg0 : i32, i32
  }
}

</mosaic_0001>

<llo_original>
// kernel: housing_nn_forward.1
$region0: #{housing_nn_forward.1}
  #allocation0 [shape = 'u32[]', space=smem, size = 0x4, offset = 0x4, fixed_abs, tag = 'smem constant byte address 0x4 - core index']
  #allocation1 [shape = 'u32[72,128]{1,0:T(1,128)}', space=vmem, size = 0x9000, scoped, tag = 'internal scratch']
  #allocation2 [shape = 'f32[1,1]{1,0:T(1,128)S(1)}', space=vmem, size = 0x200, scoped, tag = 'scoped memory for housing_nn_forward.1']
  %s0 = inlined_call_operand.vmem [shape: f32[4,1024], index: 0, kind: input, shape index: {}]
  %s1 = inlined_call_operand.vmem [shape: f32[30,4], index: 1, kind: input, shape index: {}]
  %s2 = inlined_call_operand.vmem [shape: f32[30,1], index: 2, kind: input, shape index: {}]
  %s3 = inlined_call_operand.vmem [shape: f32[30,30], index: 3, kind: input, shape index: {}]
  %s4 = inlined_call_operand.vmem [shape: f32[30,1], index: 4, kind: input, shape index: {}]
  %s5 = inlined_call_operand.vmem [shape: f32[30,30], index: 5, kind: input, shape index: {}]
  %s6 = inlined_call_operand.vmem [shape: f32[30,1], index: 6, kind: input, shape index: {}]
  %s7 = inlined_call_operand.vmem [shape: f32[1,30], index: 7, kind: input, shape index: {}]
  %s8 = inlined_call_operand.<no memory space> [shape: f32[1,1], index: 8, kind: input, shape index: {}]
  %s9 = inlined_call_operand.vmem [shape: f32[1,1024], index: 9, kind: output, shape index: {}]
  %s10 = sld [smem:[#allocation0]]
  $region69: #{housing_nn_forward.1} parent=0
    _
  %s12 = ssub.s32 1, %s10
  %s13 = scalar_select 0, %s12, %s10
  %v14 = vstv %s8
  %15 = vst [vmem:[#allocation2] sm:$0x1] %v14
  loop: start=0, step=1, limit=4
  $region2: #{housing_nn_forward.1} parent=0 // loop_pre_header
    _
  $region3: #{housing_nn_forward.1} parent=0 // loop_header
    %s17 = sphi 0, %s21
    %p18 = scmp.ge.s32.totalorder %s17, 4
    %s27 = sphi 0, %s29
    %s30 = sphi 0, %s27
    %s31 = sphi 0, %s30
    %s47 = sphi 0, %s31
    %s51 = sphi 0, %s51
    %s53 = sphi 0, %s51
    %s54 = sphi 0, %s53
    %s68 = sphi 0, %s54
    %s72 = sphi 0, %s72
    %s74 = sphi 0, %s72
    %s75 = sphi 0, %s74
    %s89 = sphi 0, %s75
    %s93 = sphi 0, %s93
    %s95 = sphi 0, %s93
    %s96 = sphi 0, %s95
    %s110 = sphi 0, %s96
    %s114 = sphi 0, %s114
    %s116 = sphi 0, %s114
    %s117 = sphi 0, %s116
    %s131 = sphi 0, %s117
    %s135 = sphi 0, %s135
    %s137 = sphi 0, %s135
    %s138 = sphi 0, %s137
    %s152 = sphi 0, %s138
    %s156 = sphi 0, %s156
    %s158 = sphi 0, %s156
    %s159 = sphi 0, %s158
    %s173 = sphi 0, %s159
    %s177 = sphi 0, %s177
    %s179 = sphi 0, %s177
    %s180 = sphi 0, %s179
    %s194 = sphi 0, %s180
    %s198 = sphi 0, %s198
    %s200 = sphi 0, %s198
    %s201 = sphi 0, %s200
    %s215 = sphi 0, %s201
    %s221 = sphi 0, %s223
    %s224 = sphi 0, %s221
    %s225 = sphi 0, %s224
    %s241 = sphi 0, %s225
  $region4: #{housing_nn_forward.1} parent=0 // loop_header_branch
    %20 = sbr.rel (%p18) target = $region8
  $region5: #{housing_nn_forward.1} parent=0 // loop_body
    %s22 = ssub.s32 %s17, 1
    %s23 = ssub.s32 %s17, 2
    %s24 = sadd.s32 %s17, 1
    %s25 = ssub.s32 %s17, %s24
    %p26 = scmp.eq.s32.totalorder %s25, 0
    %s28 = sadd.s32 %s27, 1
    %s29 = scalar_select %p26, %s27, %s28
    %p32 = pneg %p26
    %p33 = scmp.eq.s32.totalorder %s17, 1
    %p34 = por %p32, %p33
    %p35 = scmp.ne.s32.totalorder %s27, %s30
    %p36 = scmp.eq.s32.totalorder %s17, 0
    %p37 = por %p35, %p36
    %p38 = scmp.ne.s32.totalorder %s27, %s30
    %p39 = scmp.eq.s32.totalorder %s22, 1
    %p40 = por %p38, %p39
    %p41 = scmp.ne.s32.totalorder %s30, %s31
    %p42 = scmp.eq.s32.totalorder %s22, 0
    %p43 = por %p41, %p42
    %p44 = scmp.ne.s32.totalorder %s30, %s31
    %p45 = scmp.eq.s32.totalorder %s23, 1
    %p46 = por %p44, %p45
    %p48 = scmp.ne.s32.totalorder %s31, %s47
    %p49 = scmp.eq.s32.totalorder %s23, 0
    %p50 = por %p48, %p49
    %s52 = sadd.s32 %s51, 1
    %p55 = scmp.eq.s32.totalorder %s17, 1
    %p56 = scmp.ne.s32.totalorder %s51, %s53
    %p57 = scmp.eq.s32.totalorder %s17, 0
    %p58 = por %p56, %p57
    %p59 = scmp.ne.s32.totalorder %s51, %s53
    %p60 = scmp.eq.s32.totalorder %s22, 1
    %p61 = por %p59, %p60
    %p62 = scmp.ne.s32.totalorder %s53, %s54
    %p63 = scmp.eq.s32.totalorder %s22, 0
    %p64 = por %p62, %p63
    %p65 = scmp.ne.s32.totalorder %s53, %s54
    %p66 = scmp.eq.s32.totalorder %s23, 1
    %p67 = por %p65, %p66
    %p69 = scmp.ne.s32.totalorder %s54, %s68
    %p70 = scmp.eq.s32.totalorder %s23, 0
    %p71 = por %p69, %p70
    %s73 = sadd.s32 %s72, 1
    %p76 = scmp.eq.s32.totalorder %s17, 1
    %p77 = scmp.ne.s32.totalorder %s72, %s74
    %p78 = scmp.eq.s32.totalorder %s17, 0
    %p79 = por %p77, %p78
    %p80 = scmp.ne.s32.totalorder %s72, %s74
    %p81 = scmp.eq.s32.totalorder %s22, 1
    %p82 = por %p80, %p81
    %p83 = scmp.ne.s32.totalorder %s74, %s75
    %p84 = scmp.eq.s32.totalorder %s22, 0
    %p85 = por %p83, %p84
    %p86 = scmp.ne.s32.totalorder %s74, %s75
    %p87 = scmp.eq.s32.totalorder %s23, 1
    %p88 = por %p86, %p87
    %p90 = scmp.ne.s32.totalorder %s75, %s89
    %p91 = scmp.eq.s32.totalorder %s23, 0
    %p92 = por %p90, %p91
    %s94 = sadd.s32 %s93, 1
    %p97 = scmp.eq.s32.totalorder %s17, 1
    %p98 = scmp.ne.s32.totalorder %s93, %s95
    %p99 = scmp.eq.s32.totalorder %s17, 0
    %p100 = por %p98, %p99
    %p101 = scmp.ne.s32.totalorder %s93, %s95
    %p102 = scmp.eq.s32.totalorder %s22, 1
    %p103 = por %p101, %p102
    %p104 = scmp.ne.s32.totalorder %s95, %s96
    %p105 = scmp.eq.s32.totalorder %s22, 0
    %p106 = por %p104, %p105
    %p107 = scmp.ne.s32.totalorder %s95, %s96
    %p108 = scmp.eq.s32.totalorder %s23, 1
    %p109 = por %p107, %p108
    %p111 = scmp.ne.s32.totalorder %s96, %s110
    %p112 = scmp.eq.s32.totalorder %s23, 0
    %p113 = por %p111, %p112
    %s115 = sadd.s32 %s114, 1
    %p118 = scmp.eq.s32.totalorder %s17, 1
    %p119 = scmp.ne.s32.totalorder %s114, %s116
    %p120 = scmp.eq.s32.totalorder %s17, 0
    %p121 = por %p119, %p120
    %p122 = scmp.ne.s32.totalorder %s114, %s116
    %p123 = scmp.eq.s32.totalorder %s22, 1
    %p124 = por %p122, %p123
    %p125 = scmp.ne.s32.totalorder %s116, %s117
    %p126 = scmp.eq.s32.totalorder %s22, 0
    %p127 = por %p125, %p126
    %p128 = scmp.ne.s32.totalorder %s116, %s117
    %p129 = scmp.eq.s32.totalorder %s23, 1
    %p130 = por %p128, %p129
    %p132 = scmp.ne.s32.totalorder %s117, %s131
    %p133 = scmp.eq.s32.totalorder %s23, 0
    %p134 = por %p132, %p133
    %s136 = sadd.s32 %s135, 1
    %p139 = scmp.eq.s32.totalorder %s17, 1
    %p140 = scmp.ne.s32.totalorder %s135, %s137
    %p141 = scmp.eq.s32.totalorder %s17, 0
    %p142 = por %p140, %p141
    %p143 = scmp.ne.s32.totalorder %s135, %s137
    %p144 = scmp.eq.s32.totalorder %s22, 1
    %p145 = por %p143, %p144
    %p146 = scmp.ne.s32.totalorder %s137, %s138
    %p147 = scmp.eq.s32.totalorder %s22, 0
    %p148 = por %p146, %p147
    %p149 = scmp.ne.s32.totalorder %s137, %s138
    %p150 = scmp.eq.s32.totalorder %s23, 1
    %p151 = por %p149, %p150
    %p153 = scmp.ne.s32.totalorder %s138, %s152
    %p154 = scmp.eq.s32.totalorder %s23, 0
    %p155 = por %p153, %p154
    %s157 = sadd.s32 %s156, 1
    %p160 = scmp.eq.s32.totalorder %s17, 1
    %p161 = scmp.ne.s32.totalorder %s156, %s158
    %p162 = scmp.eq.s32.totalorder %s17, 0
    %p163 = por %p161, %p162
    %p164 = scmp.ne.s32.totalorder %s156, %s158
    %p165 = scmp.eq.s32.totalorder %s22, 1
    %p166 = por %p164, %p165
    %p167 = scmp.ne.s32.totalorder %s158, %s159
    %p168 = scmp.eq.s32.totalorder %s22, 0
    %p169 = por %p167, %p168
    %p170 = scmp.ne.s32.totalorder %s158, %s159
    %p171 = scmp.eq.s32.totalorder %s23, 1
    %p172 = por %p170, %p171
    %p174 = scmp.ne.s32.totalorder %s159, %s173
    %p175 = scmp.eq.s32.totalorder %s23, 0
    %p176 = por %p174, %p175
    %s178 = sadd.s32 %s177, 1
    %p181 = scmp.eq.s32.totalorder %s17, 1
    %p182 = scmp.ne.s32.totalorder %s177, %s179
    %p183 = scmp.eq.s32.totalorder %s17, 0
    %p184 = por %p182, %p183
    %p185 = scmp.ne.s32.totalorder %s177, %s179
    %p186 = scmp.eq.s32.totalorder %s22, 1
    %p187 = por %p185, %p186
    %p188 = scmp.ne.s32.totalorder %s179, %s180
    %p189 = scmp.eq.s32.totalorder %s22, 0
    %p190 = por %p188, %p189
    %p191 = scmp.ne.s32.totalorder %s179, %s180
    %p192 = scmp.eq.s32.totalorder %s23, 1
    %p193 = por %p191, %p192
    %p195 = scmp.ne.s32.totalorder %s180, %s194
    %p196 = scmp.eq.s32.totalorder %s23, 0
    %p197 = por %p195, %p196
    %s199 = sadd.s32 %s198, 1
    %p202 = scmp.eq.s32.totalorder %s17, 1
    %p203 = scmp.ne.s32.totalorder %s198, %s200
    %p204 = scmp.eq.s32.totalorder %s17, 0
    %p205 = por %p203, %p204
    %p206 = scmp.ne.s32.totalorder %s198, %s200
    %p207 = scmp.eq.s32.totalorder %s22, 1
    %p208 = por %p206, %p207
    %p209 = scmp.ne.s32.totalorder %s200, %s201
    %p210 = scmp.eq.s32.totalorder %s22, 0
    %p211 = por %p209, %p210
    %p212 = scmp.ne.s32.totalorder %s200, %s201
    %p213 = scmp.eq.s32.totalorder %s23, 1
    %p214 = por %p212, %p213
    %p216 = scmp.ne.s32.totalorder %s201, %s215
    %p217 = scmp.eq.s32.totalorder %s23, 0
    %p218 = por %p216, %p217
    %s219 = ssub.s32 %s17, %s24
    %p220 = scmp.eq.s32.totalorder %s219, 0
    %s222 = sadd.s32 %s221, 1
    %s223 = scalar_select %p220, %s221, %s222
    %p226 = pneg %p220
    %p227 = scmp.eq.s32.totalorder %s17, 1
    %p228 = por %p226, %p227
    %p229 = scmp.ne.s32.totalorder %s221, %s224
    %p230 = scmp.eq.s32.totalorder %s17, 0
    %p231 = por %p229, %p230
    %p232 = scmp.ne.s32.totalorder %s221, %s224
    %p233 = scmp.eq.s32.totalorder %s22, 1
    %p234 = por %p232, %p233
    %p235 = scmp.ne.s32.totalorder %s224, %s225
    %p236 = scmp.eq.s32.totalorder %s22, 0
    %p237 = por %p235, %p236
    %p238 = scmp.ne.s32.totalorder %s224, %s225
    %p239 = scmp.eq.s32.totalorder %s23, 1
    %p240 = por %p238, %p239
    %p242 = scmp.ne.s32.totalorder %s225, %s241
    %p243 = scmp.eq.s32.totalorder %s23, 0
    %p244 = por %p242, %p243
    %p245 = scmp.le.s32.totalorder 1, %s17
    %p246 = scmp.lt.s32.totalorder %s17, 3
    %p247 = pnand %p245, %p246
    %p248 = pneg %p247
    // Predicated region
    $region9: #{housing_nn_forward.1} parent=5 // pred_check
      _
    $region10: #{housing_nn_forward.1} parent=5 // pred_check_branch
      %250 = sbr.rel (%p247) target = $region12
    $region11: #{housing_nn_forward.1} parent=5 // pred_region
      %s251 = ssub.s32 %s17, 1
      // Predicated region
      $region13: #{housing_nn_forward.1} parent=11 // pred_check
        %p252 = pneg %p64
      $region14: #{housing_nn_forward.1} parent=11 // pred_check_branch
        %254 = sbr.rel (%p252) target = $region16
      $region15: #{housing_nn_forward.1} parent=11 // pred_region
        _
      $region16: #{housing_nn_forward.1} parent=11 // pred_fallthru
        _
      // Predicated region
      $region17: #{housing_nn_forward.1} parent=11 // pred_check
        %p255 = pneg %p85
      $region18: #{housing_nn_forward.1} parent=11 // pred_check_branch
        %257 = sbr.rel (%p255) target = $region20
      $region19: #{housing_nn_forward.1} parent=11 // pred_region
        _
      $region20: #{housing_nn_forward.1} parent=11 // pred_fallthru
        _
      // Predicated region
      $region21: #{housing_nn_forward.1} parent=11 // pred_check
        %p258 = pneg %p106
      $region22: #{housing_nn_forward.1} parent=11 // pred_check_branch
        %260 = sbr.rel (%p258) target = $region24
      $region23: #{housing_nn_forward.1} parent=11 // pred_region
        _
      $region24: #{housing_nn_forward.1} parent=11 // pred_fallthru
        _
      // Predicated region
      $region25: #{housing_nn_forward.1} parent=11 // pred_check
        %p261 = pneg %p127
      $region26: #{housing_nn_forward.1} parent=11 // pred_check_branch
        %263 = sbr.rel (%p261) target = $region28
      $region27: #{housing_nn_forward.1} parent=11 // pred_region
        _
      $region28: #{housing_nn_forward.1} parent=11 // pred_fallthru
        _
      // Predicated region
      $region29: #{housing_nn_forward.1} parent=11 // pred_check
        %p264 = pneg %p148
      $region30: #{housing_nn_forward.1} parent=11 // pred_check_branch
        %266 = sbr.rel (%p264) target = $region32
      $region31: #{housing_nn_forward.1} parent=11 // pred_region
        _
      $region32: #{housing_nn_forward.1} parent=11 // pred_fallthru
        _
      // Predicated region
      $region33: #{housing_nn_forward.1} parent=11 // pred_check
        %p267 = pneg %p169
      $region34: #{housing_nn_forward.1} parent=11 // pred_check_branch
        %269 = sbr.rel (%p267) target = $region36
      $region35: #{housing_nn_forward.1} parent=11 // pred_region
        _
      $region36: #{housing_nn_forward.1} parent=11 // pred_fallthru
        _
      // Predicated region
      $region37: #{housing_nn_forward.1} parent=11 // pred_check
        %p270 = pneg %p190
      $region38: #{housing_nn_forward.1} parent=11 // pred_check_branch
        %272 = sbr.rel (%p270) target = $region40
      $region39: #{housing_nn_forward.1} parent=11 // pred_region
        _
      $region40: #{housing_nn_forward.1} parent=11 // pred_fallthru
        _
      // Predicated region
      $region41: #{housing_nn_forward.1} parent=11 // pred_check
        %p273 = pneg %p211
      $region42: #{housing_nn_forward.1} parent=11 // pred_check_branch
        %275 = sbr.rel (%p273) target = $region44
      $region43: #{housing_nn_forward.1} parent=11 // pred_region
        _
      $region44: #{housing_nn_forward.1} parent=11 // pred_fallthru
        _
    $region12: #{housing_nn_forward.1} parent=5 // pred_fallthru
      _
    %p276 = scmp.lt.s32.totalorder %s17, 2
    // Predicated region
    $region45: #{housing_nn_forward.1} parent=5 // pred_check
      %p277 = pneg %p276
    $region46: #{housing_nn_forward.1} parent=5 // pred_check_branch
      %279 = sbr.rel (%p277) target = $region48
    $region47: #{housing_nn_forward.1} parent=5 // pred_region
      // Predicated region
      $region49: #{housing_nn_forward.1} parent=47 // pred_check
        %p280 = pneg %p37
      $region50: #{housing_nn_forward.1} parent=47 // pred_check_branch
        %282 = sbr.rel (%p280) target = $region52
      $region51: #{housing_nn_forward.1} parent=47 // pred_region
        %s283 = smul.u32 4, %s17
        %p284 = scmp.lt.s32.totalorder %s283, 7
        %s285 = scalar_select %p284, %s283, 7
        %s286 = smul.addr %s285, 4
        %s287 = scalar_lea.vmem %s0, %s286
        %s288 = smul.u32 4, %s17
      $region52: #{housing_nn_forward.1} parent=47 // pred_fallthru
        _
    $region48: #{housing_nn_forward.1} parent=5 // pred_fallthru
      _
    %p289 = scmp.le.s32.totalorder 1, %s17
    %p290 = scmp.lt.s32.totalorder %s17, 3
    %p291 = pnand %p289, %p290
    %p292 = pneg %p291
    // Predicated region
    $region53: #{housing_nn_forward.1} parent=5 // pred_check
      _
    $region54: #{housing_nn_forward.1} parent=5 // pred_check_branch
      %294 = sbr.rel (%p291) target = $region56
    $region55: #{housing_nn_forward.1} parent=5 // pred_region
      %s295 = ssub.s32 %s17, 1
      %s296 = smul.u32 4, %s22
      %p297 = scmp.lt.s32.totalorder %s296, 7
      %s298 = scalar_select %p297, %s296, 7
      %s299 = smul.addr %s298, 4
      %s300 = scalar_lea.vmem %s0, %s299
      %p301 = pneg %p43
      %p302 = pneg %p40
      %p303 = pneg %p64
      %p304 = pneg %p61
      %p305 = pneg %p85
      %p306 = pneg %p82
      %p307 = pneg %p106
      %p308 = pneg %p103
      %p309 = pneg %p127
      %p310 = pneg %p124
      %p311 = pneg %p148
      %p312 = pneg %p145
      %p313 = pneg %p169
      %p314 = pneg %p166
      %p315 = pneg %p190
      %p316 = pneg %p187
      %p317 = pneg %p211
      %p318 = pneg %p208
      %p319 = pneg %p237
      %p320 = pneg %p234
      %s321 = smul.u32 4, %s22
      %p322 = scmp.lt.s32.totalorder %s321, 7
      %s323 = scalar_select %p322, %s321, 7
      %s324 = scalar_lea.vmem %s9, %s323
      %s325 = smul.u32 4, %s22
      %p326 = scmp.lt.s32.totalorder %s325, 7
      %s327 = scalar_select %p326, %s325, 7
      %s328 = smul.addr %s327, 4
      %s329 = scalar_lea.vmem %s0, %s328
      %s330 = smul.u32 4, %s22
      %s331 = smul.u32 4, %s22
      %p332 = scmp.lt.s32.totalorder %s331, 7
      %s333 = scalar_select %p332, %s331, 7
      %s334 = scalar_lea.vmem %s9, %s333
      %s335 = smul.u32 4, %s22
      %v336 = vld [vmem:[%s329] sm:$0xff]
      %v337 = vld [vmem:[%s329 + $0x8] sm:$0xff]
      %v338 = vld [vmem:[%s1] sm:$0xff]
      %v339 = vld [vmem:[%s1 + $0x8] sm:$0xff]
      %v340 = vld [vmem:[%s1 + $0x10] sm:$0xff]
      %v341 = vld [vmem:[%s1 + $0x18] sm:$0x3f]
      %v342 = vld [vmem:[%s2] sm:$0xff]
      %v343 = vld [vmem:[%s2 + $0x8] sm:$0xff]
      %v344 = vld [vmem:[%s2 + $0x10] sm:$0xff]
      %v345 = vld [vmem:[%s2 + $0x18] sm:$0x3f]
      %347 = vset.pattern.permute.xlu0 0
      %348 = vperm.xlu0 %347, %v342
      %v349 = vpop.permute.xlu0 %348
      %352 = vset.pattern.permute.xlu0 0
      %353 = vperm.xlu0 %352, %v343
      %v354 = vpop.permute.xlu0 %353
      %357 = vset.pattern.permute.xlu0 0
      %358 = vperm.xlu0 %357, %v344
      %v359 = vpop.permute.xlu0 %358
      %362 = vset.pattern.permute.xlu0 0
      %363 = vperm.xlu0 %362, %v345
      %v364 = vpop.permute.xlu0 %363
      %368 = vst [vmem:[#allocation1] ss:$2 sm:$0xff] %v336
      %s369 = scalar_lea.vmem [#allocation1], 16
      %370 = vst [vmem:[%s369] ss:$2 sm:$0xff] %v337
      %v371 = vld.sshfl [vmem:[#allocation1] sm:$0xff pattern:$0x75316420]
      %v372 = vld.sshfl [vmem:[#allocation1 + $0x8] sm:$0xff pattern:$0x75316420]
      %v373 = vld.sshfl [vmem:[#allocation1 + $0x10] sm:$0xff pattern:$0x75316420]
      %v374 = vld.sshfl [vmem:[#allocation1 + $0x18] sm:$0xff pattern:$0x75316420]
      %vm375 = vcmask 31744
      %v377 = vsel %vm375, %v338, 0
      %v380 = vsel %vm375, %v339, 0
      %v383 = vsel %vm375, %v340, 0
      %v386 = vsel %vm375, %v341, 0
      %vm388 = vcmask 1043456
      %v389 = vsel %vm388, %v371, 0
      %v391 = vsel %vm388, %v372, 0
      %v393 = vsel %vm388, %v373, 0
      %v395 = vsel %vm388, %v374, 0
      %397 = vmatpush.msra.mxu0 0.0
      %398 = vmatpush.msra.mxu0 0.0
      %399 = vmatpush.msra.mxu0 0.0
      %400 = vmatpush.msra.mxu0 0.0
      %401 = vmatpush.msra.mxu0 0.0
      %402 = vmatpush.msra.mxu0 0.0
      %403 = vmatpush.msra.mxu0 0.0
      %404 = vmatpush.msra.mxu0 0.0
      %405 = vmatpush.msra.mxu0 0.0
      %406 = vmatpush.msra.mxu0 0.0
      %407 = vmatpush.msra.mxu0 0.0
      %408 = vmatpush.msra.mxu0 0.0
      %409 = vmatpush.msra.mxu0 0.0
      %410 = vmatpush.msra.mxu0 0.0
      %411 = vmatpush.msra.mxu0 0.0
      %412 = vmatpush.msra.mxu0 %v389
      %413 = vmatmul.f32.gmra.mxu0 %v377
      %v414 = vpop.f32.mrf.mxu0
      %v415 = vadd.f32 %v349, %v414
      %416 = vmatmul.f32.gmra.mxu0 %v380
      %v417 = vpop.f32.mrf.mxu0
      %v418 = vadd.f32 %v354, %v417
      %419 = vmatmul.f32.gmra.mxu0 %v383
      %v420 = vpop.f32.mrf.mxu0
      %v421 = vadd.f32 %v359, %v420
      %422 = vmatmul.f32.gmra.mxu0 %v386
      %v423 = vpop.f32.mrf.mxu0
      %v424 = vadd.f32 %v364, %v423
      %425 = vdwg.mxu0
      %426 = vmatpush.msra.mxu0 0.0
      %427 = vmatpush.msra.mxu0 0.0
      %428 = vmatpush.msra.mxu0 0.0
      %429 = vmatpush.msra.mxu0 0.0
      %430 = vmatpush.msra.mxu0 0.0
      %431 = vmatpush.msra.mxu0 0.0
      %432 = vmatpush.msra.mxu0 0.0
      %433 = vmatpush.msra.mxu0 0.0
      %434 = vmatpush.msra.mxu0 0.0
      %435 = vmatpush.msra.mxu0 0.0
      %436 = vmatpush.msra.mxu0 0.0
      %437 = vmatpush.msra.mxu0 0.0
      %438 = vmatpush.msra.mxu0 0.0
      %439 = vmatpush.msra.mxu0 0.0
      %440 = vmatpush.msra.mxu0 0.0
      %441 = vmatpush.msra.mxu0 %v391
      %442 = vmatmul.f32.gmra.mxu0 %v377
      %v443 = vpop.f32.mrf.mxu0
      %v444 = vadd.f32 %v349, %v443
      %445 = vmatmul.f32.gmra.mxu0 %v380
      %v446 = vpop.f32.mrf.mxu0
      %v447 = vadd.f32 %v354, %v446
      %448 = vmatmul.f32.gmra.mxu0 %v383
      %v449 = vpop.f32.mrf.mxu0
      %v450 = vadd.f32 %v359, %v449
      %451 = vmatmul.f32.gmra.mxu0 %v386
      %v452 = vpop.f32.mrf.mxu0
      %v453 = vadd.f32 %v364, %v452
      %454 = vdwg.mxu0
      %455 = vmatpush.msra.mxu0 0.0
      %456 = vmatpush.msra.mxu0 0.0
      %457 = vmatpush.msra.mxu0 0.0
      %458 = vmatpush.msra.mxu0 0.0
      %459 = vmatpush.msra.mxu0 0.0
      %460 = vmatpush.msra.mxu0 0.0
      %461 = vmatpush.msra.mxu0 0.0
      %462 = vmatpush.msra.mxu0 0.0
      %463 = vmatpush.msra.mxu0 0.0
      %464 = vmatpush.msra.mxu0 0.0
      %465 = vmatpush.msra.mxu0 0.0
      %466 = vmatpush.msra.mxu0 0.0
      %467 = vmatpush.msra.mxu0 0.0
      %468 = vmatpush.msra.mxu0 0.0
      %469 = vmatpush.msra.mxu0 0.0
      %470 = vmatpush.msra.mxu0 %v393
      %471 = vmatmul.f32.gmra.mxu0 %v377
      %v472 = vpop.f32.mrf.mxu0
      %v473 = vadd.f32 %v349, %v472
      %474 = vmatmul.f32.gmra.mxu0 %v380
      %v475 = vpop.f32.mrf.mxu0
      %v476 = vadd.f32 %v354, %v475
      %477 = vmatmul.f32.gmra.mxu0 %v383
      %v478 = vpop.f32.mrf.mxu0
      %v479 = vadd.f32 %v359, %v478
      %480 = vmatmul.f32.gmra.mxu0 %v386
      %v481 = vpop.f32.mrf.mxu0
      %v482 = vadd.f32 %v364, %v481
      %483 = vdwg.mxu0
      %484 = vmatpush.msra.mxu0 0.0
      %485 = vmatpush.msra.mxu0 0.0
      %486 = vmatpush.msra.mxu0 0.0
      %487 = vmatpush.msra.mxu0 0.0
      %488 = vmatpush.msra.mxu0 0.0
      %489 = vmatpush.msra.mxu0 0.0
      %490 = vmatpush.msra.mxu0 0.0
      %491 = vmatpush.msra.mxu0 0.0
      %492 = vmatpush.msra.mxu0 0.0
      %493 = vmatpush.msra.mxu0 0.0
      %494 = vmatpush.msra.mxu0 0.0
      %495 = vmatpush.msra.mxu0 0.0
      %496 = vmatpush.msra.mxu0 0.0
      %497 = vmatpush.msra.mxu0 0.0
      %498 = vmatpush.msra.mxu0 0.0
      %499 = vmatpush.msra.mxu0 %v395
      %500 = vmatmul.f32.gmra.mxu0 %v377
      %v501 = vpop.f32.mrf.mxu0
      %v502 = vadd.f32 %v349, %v501
      %503 = vmatmul.f32.gmra.mxu0 %v380
      %v504 = vpop.f32.mrf.mxu0
      %v505 = vadd.f32 %v354, %v504
      %506 = vmatmul.f32.gmra.mxu0 %v383
      %v507 = vpop.f32.mrf.mxu0
      %v508 = vadd.f32 %v359, %v507
      %509 = vmatmul.f32.gmra.mxu0 %v386
      %v510 = vpop.f32.mrf.mxu0
      %v511 = vadd.f32 %v364, %v510
      %512 = vdwg.mxu0
      %v513 = vmax.f32 %v415, 0.0
      %v514 = vmax.f32 %v444, 0.0
      %v515 = vmax.f32 %v473, 0.0
      %v516 = vmax.f32 %v502, 0.0
      %v517 = vmax.f32 %v418, 0.0
      %v518 = vmax.f32 %v447, 0.0
      %v519 = vmax.f32 %v476, 0.0
      %v520 = vmax.f32 %v505, 0.0
      %v521 = vmax.f32 %v421, 0.0
      %v522 = vmax.f32 %v450, 0.0
      %v523 = vmax.f32 %v479, 0.0
      %v524 = vmax.f32 %v508, 0.0
      %v525 = vmax.f32 %v424, 0.0
      %v526 = vmax.f32 %v453, 0.0
      %v527 = vmax.f32 %v482, 0.0
      %v528 = vmax.f32 %v511, 0.0
      %v529 = vld [vmem:[%s3] sm:$0xff]
      %v530 = vld [vmem:[%s3 + $0x8] sm:$0xff]
      %v531 = vld [vmem:[%s3 + $0x10] sm:$0xff]
      %v532 = vld [vmem:[%s3 + $0x18] sm:$0x3f]
      %v533 = vld [vmem:[%s4] sm:$0xff]
      %v534 = vld [vmem:[%s4 + $0x8] sm:$0xff]
      %v535 = vld [vmem:[%s4 + $0x10] sm:$0xff]
      %v536 = vld [vmem:[%s4 + $0x18] sm:$0x3f]
      %538 = vset.pattern.permute.xlu0 0
      %539 = vperm.xlu0 %538, %v533
      %v540 = vpop.permute.xlu0 %539
      %543 = vset.pattern.permute.xlu0 0
      %544 = vperm.xlu0 %543, %v534
      %v545 = vpop.permute.xlu0 %544
      %548 = vset.pattern.permute.xlu0 0
      %549 = vperm.xlu0 %548, %v535
      %v550 = vpop.permute.xlu0 %549
      %553 = vset.pattern.permute.xlu0 0
      %554 = vperm.xlu0 %553, %v536
      %v555 = vpop.permute.xlu0 %554
      %vm557 = vcmask 244736
      %v559 = vsel %vm557, %v529, 0
      %v562 = vsel %vm557, %v530, 0
      %v565 = vsel %vm557, %v531, 0
      %v568 = vsel %vm557, %v532, 0
      %vm570 = vcmask 1045504
      %v572 = vsel %vm570, %v525, 0
      %v575 = vsel %vm570, %v526, 0
      %v578 = vsel %vm570, %v527, 0
      %v581 = vsel %vm570, %v528, 0
      %583 = vmatpush.msra.mxu0 0.0
      %584 = vmatpush.msra.mxu0 0.0
      %585 = vmatpush.msra.mxu0 0.0
      %586 = vmatpush.msra.mxu0 0.0
      %587 = vmatpush.msra.mxu0 0.0
      %588 = vmatpush.msra.mxu0 0.0
      %589 = vmatpush.msra.mxu0 0.0
      %590 = vmatpush.msra.mxu0 0.0
      %591 = vmatpush.msra.mxu0 0.0
      %592 = vmatpush.msra.mxu0 0.0
      %593 = vmatpush.msra.mxu0 0.0
      %594 = vmatpush.msra.mxu0 0.0
      %595 = vmatpush.msra.mxu0 %v572
      %596 = vmatpush.msra.mxu0 %v521
      %597 = vmatpush.msra.mxu0 %v517
      %598 = vmatpush.msra.mxu0 %v513
      %599 = vmatmul.f32.gmra.mxu0 %v559
      %v600 = vpop.f32.mrf.mxu0
      %v601 = vadd.f32 %v540, %v600
      %602 = vmatmul.f32.gmra.mxu0 %v562
      %v603 = vpop.f32.mrf.mxu0
      %v604 = vadd.f32 %v545, %v603
      %605 = vmatmul.f32.gmra.mxu0 %v565
      %v606 = vpop.f32.mrf.mxu0
      %v607 = vadd.f32 %v550, %v606
      %608 = vmatmul.f32.gmra.mxu0 %v568
      %v609 = vpop.f32.mrf.mxu0
      %v610 = vadd.f32 %v555, %v609
      %611 = vdwg.mxu0
      %612 = vmatpush.msra.mxu0 0.0
      %613 = vmatpush.msra.mxu0 0.0
      %614 = vmatpush.msra.mxu0 0.0
      %615 = vmatpush.msra.mxu0 0.0
      %616 = vmatpush.msra.mxu0 0.0
      %617 = vmatpush.msra.mxu0 0.0
      %618 = vmatpush.msra.mxu0 0.0
      %619 = vmatpush.msra.mxu0 0.0
      %620 = vmatpush.msra.mxu0 0.0
      %621 = vmatpush.msra.mxu0 0.0
      %622 = vmatpush.msra.mxu0 0.0
      %623 = vmatpush.msra.mxu0 0.0
      %624 = vmatpush.msra.mxu0 %v575
      %625 = vmatpush.msra.mxu0 %v522
      %626 = vmatpush.msra.mxu0 %v518
      %627 = vmatpush.msra.mxu0 %v514
      %628 = vmatmul.f32.gmra.mxu0 %v559
      %v629 = vpop.f32.mrf.mxu0
      %v630 = vadd.f32 %v540, %v629
      %631 = vmatmul.f32.gmra.mxu0 %v562
      %v632 = vpop.f32.mrf.mxu0
      %v633 = vadd.f32 %v545, %v632
      %634 = vmatmul.f32.gmra.mxu0 %v565
      %v635 = vpop.f32.mrf.mxu0
      %v636 = vadd.f32 %v550, %v635
      %637 = vmatmul.f32.gmra.mxu0 %v568
      %v638 = vpop.f32.mrf.mxu0
      %v639 = vadd.f32 %v555, %v638
      %640 = vdwg.mxu0
      %641 = vmatpush.msra.mxu0 0.0
      %642 = vmatpush.msra.mxu0 0.0
      %643 = vmatpush.msra.mxu0 0.0
      %644 = vmatpush.msra.mxu0 0.0
      %645 = vmatpush.msra.mxu0 0.0
      %646 = vmatpush.msra.mxu0 0.0
      %647 = vmatpush.msra.mxu0 0.0
      %648 = vmatpush.msra.mxu0 0.0
      %649 = vmatpush.msra.mxu0 0.0
      %650 = vmatpush.msra.mxu0 0.0
      %651 = vmatpush.msra.mxu0 0.0
      %652 = vmatpush.msra.mxu0 0.0
      %653 = vmatpush.msra.mxu0 %v578
      %654 = vmatpush.msra.mxu0 %v523
      %655 = vmatpush.msra.mxu0 %v519
      %656 = vmatpush.msra.mxu0 %v515
      %657 = vmatmul.f32.gmra.mxu0 %v559
      %v658 = vpop.f32.mrf.mxu0
      %v659 = vadd.f32 %v540, %v658
      %660 = vmatmul.f32.gmra.mxu0 %v562
      %v661 = vpop.f32.mrf.mxu0
      %v662 = vadd.f32 %v545, %v661
      %663 = vmatmul.f32.gmra.mxu0 %v565
      %v664 = vpop.f32.mrf.mxu0
      %v665 = vadd.f32 %v550, %v664
      %666 = vmatmul.f32.gmra.mxu0 %v568
      %v667 = vpop.f32.mrf.mxu0
      %v668 = vadd.f32 %v555, %v667
      %669 = vdwg.mxu0
      %670 = vmatpush.msra.mxu0 0.0
      %671 = vmatpush.msra.mxu0 0.0
      %672 = vmatpush.msra.mxu0 0.0
      %673 = vmatpush.msra.mxu0 0.0
      %674 = vmatpush.msra.mxu0 0.0
      %675 = vmatpush.msra.mxu0 0.0
      %676 = vmatpush.msra.mxu0 0.0
      %677 = vmatpush.msra.mxu0 0.0
      %678 = vmatpush.msra.mxu0 0.0
      %679 = vmatpush.msra.mxu0 0.0
      %680 = vmatpush.msra.mxu0 0.0
      %681 = vmatpush.msra.mxu0 0.0
      %682 = vmatpush.msra.mxu0 %v581
      %683 = vmatpush.msra.mxu0 %v524
      %684 = vmatpush.msra.mxu0 %v520
      %685 = vmatpush.msra.mxu0 %v516
      %686 = vmatmul.f32.gmra.mxu0 %v559
      %v687 = vpop.f32.mrf.mxu0
      %v688 = vadd.f32 %v540, %v687
      %689 = vmatmul.f32.gmra.mxu0 %v562
      %v690 = vpop.f32.mrf.mxu0
      %v691 = vadd.f32 %v545, %v690
      %692 = vmatmul.f32.gmra.mxu0 %v565
      %v693 = vpop.f32.mrf.mxu0
      %v694 = vadd.f32 %v550, %v693
      %695 = vmatmul.f32.gmra.mxu0 %v568
      %v696 = vpop.f32.mrf.mxu0
      %v697 = vadd.f32 %v555, %v696
      %698 = vdwg.mxu0
      %v699 = vmax.f32 %v601, 0.0
      %v700 = vmax.f32 %v630, 0.0
      %v701 = vmax.f32 %v659, 0.0
      %v702 = vmax.f32 %v688, 0.0
      %v703 = vmax.f32 %v604, 0.0
      %v704 = vmax.f32 %v633, 0.0
      %v705 = vmax.f32 %v662, 0.0
      %v706 = vmax.f32 %v691, 0.0
      %v707 = vmax.f32 %v607, 0.0
      %v708 = vmax.f32 %v636, 0.0
      %v709 = vmax.f32 %v665, 0.0
      %v710 = vmax.f32 %v694, 0.0
      %v711 = vmax.f32 %v610, 0.0
      %v712 = vmax.f32 %v639, 0.0
      %v713 = vmax.f32 %v668, 0.0
      %v714 = vmax.f32 %v697, 0.0
      %v715 = vld [vmem:[%s5] sm:$0xff]
      %v716 = vld [vmem:[%s5 + $0x8] sm:$0xff]
      %v717 = vld [vmem:[%s5 + $0x10] sm:$0xff]
      %v718 = vld [vmem:[%s5 + $0x18] sm:$0x3f]
      %v719 = vld [vmem:[%s6] sm:$0xff]
      %v720 = vld [vmem:[%s6 + $0x8] sm:$0xff]
      %v721 = vld [vmem:[%s6 + $0x10] sm:$0xff]
      %v722 = vld [vmem:[%s6 + $0x18] sm:$0x3f]
      %724 = vset.pattern.permute.xlu0 0
      %725 = vperm.xlu0 %724, %v719
      %v726 = vpop.permute.xlu0 %725
      %729 = vset.pattern.permute.xlu0 0
      %730 = vperm.xlu0 %729, %v720
      %v731 = vpop.permute.xlu0 %730
      %734 = vset.pattern.permute.xlu0 0
      %735 = vperm.xlu0 %734, %v721
      %v736 = vpop.permute.xlu0 %735
      %739 = vset.pattern.permute.xlu0 0
      %740 = vperm.xlu0 %739, %v722
      %v741 = vpop.permute.xlu0 %740
      %v744 = vsel %vm557, %v715, 0
      %v747 = vsel %vm557, %v716, 0
      %v750 = vsel %vm557, %v717, 0
      %v753 = vsel %vm557, %v718, 0
      %v756 = vsel %vm570, %v711, 0
      %v759 = vsel %vm570, %v712, 0
      %v762 = vsel %vm570, %v713, 0
      %v765 = vsel %vm570, %v714, 0
      %767 = vmatpush.msra.mxu0 0.0
      %768 = vmatpush.msra.mxu0 0.0
      %769 = vmatpush.msra.mxu0 0.0
      %770 = vmatpush.msra.mxu0 0.0
      %771 = vmatpush.msra.mxu0 0.0
      %772 = vmatpush.msra.mxu0 0.0
      %773 = vmatpush.msra.mxu0 0.0
      %774 = vmatpush.msra.mxu0 0.0
      %775 = vmatpush.msra.mxu0 0.0
      %776 = vmatpush.msra.mxu0 0.0
      %777 = vmatpush.msra.mxu0 0.0
      %778 = vmatpush.msra.mxu0 0.0
      %779 = vmatpush.msra.mxu0 %v756
      %780 = vmatpush.msra.mxu0 %v707
      %781 = vmatpush.msra.mxu0 %v703
      %782 = vmatpush.msra.mxu0 %v699
      %783 = vmatmul.f32.gmra.mxu0 %v744
      %v784 = vpop.f32.mrf.mxu0
      %v785 = vadd.f32 %v726, %v784
      %786 = vmatmul.f32.gmra.mxu0 %v747
      %v787 = vpop.f32.mrf.mxu0
      %v788 = vadd.f32 %v731, %v787
      %789 = vmatmul.f32.gmra.mxu0 %v750
      %v790 = vpop.f32.mrf.mxu0
      %v791 = vadd.f32 %v736, %v790
      %792 = vmatmul.f32.gmra.mxu0 %v753
      %v793 = vpop.f32.mrf.mxu0
      %v794 = vadd.f32 %v741, %v793
      %795 = vdwg.mxu0
      %796 = vmatpush.msra.mxu0 0.0
      %797 = vmatpush.msra.mxu0 0.0
      %798 = vmatpush.msra.mxu0 0.0
      %799 = vmatpush.msra.mxu0 0.0
      %800 = vmatpush.msra.mxu0 0.0
      %801 = vmatpush.msra.mxu0 0.0
      %802 = vmatpush.msra.mxu0 0.0
      %803 = vmatpush.msra.mxu0 0.0
      %804 = vmatpush.msra.mxu0 0.0
      %805 = vmatpush.msra.mxu0 0.0
      %806 = vmatpush.msra.mxu0 0.0
      %807 = vmatpush.msra.mxu0 0.0
      %808 = vmatpush.msra.mxu0 %v759
      %809 = vmatpush.msra.mxu0 %v708
      %810 = vmatpush.msra.mxu0 %v704
      %811 = vmatpush.msra.mxu0 %v700
      %812 = vmatmul.f32.gmra.mxu0 %v744
      %v813 = vpop.f32.mrf.mxu0
      %v814 = vadd.f32 %v726, %v813
      %815 = vmatmul.f32.gmra.mxu0 %v747
      %v816 = vpop.f32.mrf.mxu0
      %v817 = vadd.f32 %v731, %v816
      %818 = vmatmul.f32.gmra.mxu0 %v750
      %v819 = vpop.f32.mrf.mxu0
      %v820 = vadd.f32 %v736, %v819
      %821 = vmatmul.f32.gmra.mxu0 %v753
      %v822 = vpop.f32.mrf.mxu0
      %v823 = vadd.f32 %v741, %v822
      %824 = vdwg.mxu0
      %825 = vmatpush.msra.mxu0 0.0
      %826 = vmatpush.msra.mxu0 0.0
      %827 = vmatpush.msra.mxu0 0.0
      %828 = vmatpush.msra.mxu0 0.0
      %829 = vmatpush.msra.mxu0 0.0
      %830 = vmatpush.msra.mxu0 0.0
      %831 = vmatpush.msra.mxu0 0.0
      %832 = vmatpush.msra.mxu0 0.0
      %833 = vmatpush.msra.mxu0 0.0
      %834 = vmatpush.msra.mxu0 0.0
      %835 = vmatpush.msra.mxu0 0.0
      %836 = vmatpush.msra.mxu0 0.0
      %837 = vmatpush.msra.mxu0 %v762
      %838 = vmatpush.msra.mxu0 %v709
      %839 = vmatpush.msra.mxu0 %v705
      %840 = vmatpush.msra.mxu0 %v701
      %841 = vmatmul.f32.gmra.mxu0 %v744
      %v842 = vpop.f32.mrf.mxu0
      %v843 = vadd.f32 %v726, %v842
      %844 = vmatmul.f32.gmra.mxu0 %v747
      %v845 = vpop.f32.mrf.mxu0
      %v846 = vadd.f32 %v731, %v845
      %847 = vmatmul.f32.gmra.mxu0 %v750
      %v848 = vpop.f32.mrf.mxu0
      %v849 = vadd.f32 %v736, %v848
      %850 = vmatmul.f32.gmra.mxu0 %v753
      %v851 = vpop.f32.mrf.mxu0
      %v852 = vadd.f32 %v741, %v851
      %853 = vdwg.mxu0
      %854 = vmatpush.msra.mxu0 0.0
      %855 = vmatpush.msra.mxu0 0.0
      %856 = vmatpush.msra.mxu0 0.0
      %857 = vmatpush.msra.mxu0 0.0
      %858 = vmatpush.msra.mxu0 0.0
      %859 = vmatpush.msra.mxu0 0.0
      %860 = vmatpush.msra.mxu0 0.0
      %861 = vmatpush.msra.mxu0 0.0
      %862 = vmatpush.msra.mxu0 0.0
      %863 = vmatpush.msra.mxu0 0.0
      %864 = vmatpush.msra.mxu0 0.0
      %865 = vmatpush.msra.mxu0 0.0
      %866 = vmatpush.msra.mxu0 %v765
      %867 = vmatpush.msra.mxu0 %v710
      %868 = vmatpush.msra.mxu0 %v706
      %869 = vmatpush.msra.mxu0 %v702
      %870 = vmatmul.f32.gmra.mxu0 %v744
      %v871 = vpop.f32.mrf.mxu0
      %v872 = vadd.f32 %v726, %v871
      %873 = vmatmul.f32.gmra.mxu0 %v747
      %v874 = vpop.f32.mrf.mxu0
      %v875 = vadd.f32 %v731, %v874
      %876 = vmatmul.f32.gmra.mxu0 %v750
      %v877 = vpop.f32.mrf.mxu0
      %v878 = vadd.f32 %v736, %v877
      %879 = vmatmul.f32.gmra.mxu0 %v753
      %v880 = vpop.f32.mrf.mxu0
      %v881 = vadd.f32 %v741, %v880
      %882 = vdwg.mxu0
      %v883 = vmax.f32 %v785, 0.0
      %v884 = vmax.f32 %v814, 0.0
      %v885 = vmax.f32 %v843, 0.0
      %v886 = vmax.f32 %v872, 0.0
      %v887 = vmax.f32 %v788, 0.0
      %v888 = vmax.f32 %v817, 0.0
      %v889 = vmax.f32 %v846, 0.0
      %v890 = vmax.f32 %v875, 0.0
      %v891 = vmax.f32 %v791, 0.0
      %v892 = vmax.f32 %v820, 0.0
      %v893 = vmax.f32 %v849, 0.0
      %v894 = vmax.f32 %v878, 0.0
      %v895 = vmax.f32 %v794, 0.0
      %v896 = vmax.f32 %v823, 0.0
      %v897 = vmax.f32 %v852, 0.0
      %v898 = vmax.f32 %v881, 0.0
      %v899 = vld [vmem:[%s7] sm:$0x1]
      %v900 = vld [vmem:[#allocation2] sm:$0x1]
      %902 = vset.pattern.permute.xlu0 0
      %903 = vperm.xlu0 %902, %v900
      %v904 = vpop.permute.xlu0 %903
      %v906 = vperm.slane %v904, 0
      %v908 = vsel %vm557, %v899, 0
      %v911 = vsel %vm570, %v895, 0
      %v914 = vsel %vm570, %v896, 0
      %v917 = vsel %vm570, %v897, 0
      %v920 = vsel %vm570, %v898, 0
      %922 = vmatpush.msra.mxu0 0.0
      %923 = vmatpush.msra.mxu0 0.0
      %924 = vmatpush.msra.mxu0 0.0
      %925 = vmatpush.msra.mxu0 0.0
      %926 = vmatpush.msra.mxu0 0.0
      %927 = vmatpush.msra.mxu0 0.0
      %928 = vmatpush.msra.mxu0 0.0
      %929 = vmatpush.msra.mxu0 0.0
      %930 = vmatpush.msra.mxu0 0.0
      %931 = vmatpush.msra.mxu0 0.0
      %932 = vmatpush.msra.mxu0 0.0
      %933 = vmatpush.msra.mxu0 0.0
      %934 = vmatpush.msra.mxu0 %v911
      %935 = vmatpush.msra.mxu0 %v891
      %936 = vmatpush.msra.mxu0 %v887
      %937 = vmatpush.msra.mxu0 %v883
      %938 = vmatmul.f32.gmra.mxu0 %v908
      %v939 = vpop.f32.mrf.mxu0
      %v940 = vadd.f32 %v906, %v939
      %941 = vdwg.mxu0
      %942 = vmatpush.msra.mxu0 0.0
      %943 = vmatpush.msra.mxu0 0.0
      %944 = vmatpush.msra.mxu0 0.0
      %945 = vmatpush.msra.mxu0 0.0
      %946 = vmatpush.msra.mxu0 0.0
      %947 = vmatpush.msra.mxu0 0.0
      %948 = vmatpush.msra.mxu0 0.0
      %949 = vmatpush.msra.mxu0 0.0
      %950 = vmatpush.msra.mxu0 0.0
      %951 = vmatpush.msra.mxu0 0.0
      %952 = vmatpush.msra.mxu0 0.0
      %953 = vmatpush.msra.mxu0 0.0
      %954 = vmatpush.msra.mxu0 %v914
      %955 = vmatpush.msra.mxu0 %v892
      %956 = vmatpush.msra.mxu0 %v888
      %957 = vmatpush.msra.mxu0 %v884
      %958 = vmatmul.f32.gmra.mxu0 %v908
      %v959 = vpop.f32.mrf.mxu0
      %v960 = vadd.f32 %v906, %v959
      %961 = vdwg.mxu0
      %962 = vmatpush.msra.mxu0 0.0
      %963 = vmatpush.msra.mxu0 0.0
      %964 = vmatpush.msra.mxu0 0.0
      %965 = vmatpush.msra.mxu0 0.0
      %966 = vmatpush.msra.mxu0 0.0
      %967 = vmatpush.msra.mxu0 0.0
      %968 = vmatpush.msra.mxu0 0.0
      %969 = vmatpush.msra.mxu0 0.0
      %970 = vmatpush.msra.mxu0 0.0
      %971 = vmatpush.msra.mxu0 0.0
      %972 = vmatpush.msra.mxu0 0.0
      %973 = vmatpush.msra.mxu0 0.0
      %974 = vmatpush.msra.mxu0 %v917
      %975 = vmatpush.msra.mxu0 %v893
      %976 = vmatpush.msra.mxu0 %v889
      %977 = vmatpush.msra.mxu0 %v885
      %978 = vmatmul.f32.gmra.mxu0 %v908
      %v979 = vpop.f32.mrf.mxu0
      %v980 = vadd.f32 %v906, %v979
      %981 = vdwg.mxu0
      %982 = vmatpush.msra.mxu0 0.0
      %983 = vmatpush.msra.mxu0 0.0
      %984 = vmatpush.msra.mxu0 0.0
      %985 = vmatpush.msra.mxu0 0.0
      %986 = vmatpush.msra.mxu0 0.0
      %987 = vmatpush.msra.mxu0 0.0
      %988 = vmatpush.msra.mxu0 0.0
      %989 = vmatpush.msra.mxu0 0.0
      %990 = vmatpush.msra.mxu0 0.0
      %991 = vmatpush.msra.mxu0 0.0
      %992 = vmatpush.msra.mxu0 0.0
      %993 = vmatpush.msra.mxu0 0.0
      %994 = vmatpush.msra.mxu0 %v920
      %995 = vmatpush.msra.mxu0 %v894
      %996 = vmatpush.msra.mxu0 %v890
      %997 = vmatpush.msra.mxu0 %v886
      %998 = vmatmul.f32.gmra.mxu0 %v908
      %v999 = vpop.f32.mrf.mxu0
      %v1000 = vadd.f32 %v906, %v999
      %1001 = vdwg.mxu0
      %v1002 = vxor.u32 %v940, 2147483648
      %v1003 = vxor.u32 %v960, 2147483648
      %v1004 = vxor.u32 %v980, 2147483648
      %v1005 = vxor.u32 %v1000, 2147483648
      %v1006 = vmul.f32 %v1002, 1.442695
      %v1007 = vpow.pop %v1006
      %v1008 = vmul.f32 %v1003, 1.442695
      %v1009 = vpow.pop %v1008
      %v1010 = vmul.f32 %v1004, 1.442695
      %v1011 = vpow.pop %v1010
      %v1012 = vmul.f32 %v1005, 1.442695
      %v1013 = vpow.pop %v1012
      %v1014 = vadd.f32 %v1007, 1.0
      %v1015 = vadd.f32 %v1009, 1.0
      %v1016 = vadd.f32 %v1011, 1.0
      %v1017 = vadd.f32 %v1013, 1.0
      %v1018 = vrcp.pop %v1014
      %v1019 = vmul.f32 %v1014, %v1018
      %v1020 = vsub.f32 1.0, %v1019
      %v1021 = vmul.f32 %v1018, %v1020
      %v1022 = vadd.f32 %v1018, %v1021
      %vm1023 = vweird.f32 %v1014
      %vm1024 = vweird.f32 %v1018
      %vm1025 = vmor %vm1023, %vm1024
      %v1026 = vsel %vm1025, %v1018, %v1022
      %v1027 = vand.u32 2147483647, %v1014
      %vm1028 = vcmp.eq.f32.partialorder %v1027, 8.507059e+37
      %v1029 = vand.u32 %v1014, 2147483648
      %v1030 = vor.u32 1.1754944e-38, %v1029
      %v1031 = vsel %vm1028, %v1030, %v1026
      %v1032 = vmul.f32 1.0, %v1031
      %v1033 = vrcp.pop %v1015
      %v1034 = vmul.f32 %v1015, %v1033
      %v1035 = vsub.f32 1.0, %v1034
      %v1036 = vmul.f32 %v1033, %v1035
      %v1037 = vadd.f32 %v1033, %v1036
      %vm1038 = vweird.f32 %v1015
      %vm1039 = vweird.f32 %v1033
      %vm1040 = vmor %vm1038, %vm1039
      %v1041 = vsel %vm1040, %v1033, %v1037
      %v1042 = vand.u32 2147483647, %v1015
      %vm1043 = vcmp.eq.f32.partialorder %v1042, 8.507059e+37
      %v1044 = vand.u32 %v1015, 2147483648
      %v1045 = vor.u32 1.1754944e-38, %v1044
      %v1046 = vsel %vm1043, %v1045, %v1041
      %v1047 = vmul.f32 1.0, %v1046
      %v1048 = vrcp.pop %v1016
      %v1049 = vmul.f32 %v1016, %v1048
      %v1050 = vsub.f32 1.0, %v1049
      %v1051 = vmul.f32 %v1048, %v1050
      %v1052 = vadd.f32 %v1048, %v1051
      %vm1053 = vweird.f32 %v1016
      %vm1054 = vweird.f32 %v1048
      %vm1055 = vmor %vm1053, %vm1054
      %v1056 = vsel %vm1055, %v1048, %v1052
      %v1057 = vand.u32 2147483647, %v1016
      %vm1058 = vcmp.eq.f32.partialorder %v1057, 8.507059e+37
      %v1059 = vand.u32 %v1016, 2147483648
      %v1060 = vor.u32 1.1754944e-38, %v1059
      %v1061 = vsel %vm1058, %v1060, %v1056
      %v1062 = vmul.f32 1.0, %v1061
      %v1063 = vrcp.pop %v1017
      %v1064 = vmul.f32 %v1017, %v1063
      %v1065 = vsub.f32 1.0, %v1064
      %v1066 = vmul.f32 %v1063, %v1065
      %v1067 = vadd.f32 %v1063, %v1066
      %vm1068 = vweird.f32 %v1017
      %vm1069 = vweird.f32 %v1063
      %vm1070 = vmor %vm1068, %vm1069
      %v1071 = vsel %vm1070, %v1063, %v1067
      %v1072 = vand.u32 2147483647, %v1017
      %vm1073 = vcmp.eq.f32.partialorder %v1072, 8.507059e+37
      %v1074 = vand.u32 %v1017, 2147483648
      %v1075 = vor.u32 1.1754944e-38, %v1074
      %v1076 = vsel %vm1073, %v1075, %v1071
      %v1077 = vmul.f32 1.0, %v1076
      %v1082 = vrot.slane %v1047, 7
      %v1083 = vrot.slane %v1062, 6
      %v1084 = vrot.slane %v1077, 5
      %vm1085 = vcmask 1040384
      %v1086 = vsel %vm1085, %v1032, %v1082
      %vm1087 = vcmask 1042434
      %v1088 = vsel %vm1087, %v1083, %v1084
      %vm1089 = vcmask 1041408
      %v1090 = vsel %vm1089, %v1086, %v1088
      %v1092 = vlaneseq
      %vm1093 = vcmp.ge.s32.totalorder %v1092, 0
      %vm1094 = vcmp.lt.s32.totalorder %v1092, 512
      %vm1095 = vmand %vm1093, %vm1094
      %1096 = vst.msk [vmem:[%s334] sm:$0xf] %vm1095, %v1090
      %s1097 = smul.u32 4, %s22
      %p1098 = scmp.lt.s32.totalorder %s1097, 7
      %s1099 = scalar_select %p1098, %s1097, 7
      %s1100 = scalar_lea.vmem %s9, %s1099
      // Predicated region
      $region57: #{housing_nn_forward.1} parent=55 // pred_check
        %p1101 = pneg %p234
      $region58: #{housing_nn_forward.1} parent=55 // pred_check_branch
        %1103 = sbr.rel (%p1101) target = $region60
      $region59: #{housing_nn_forward.1} parent=55 // pred_region
        %s1104 = smul.u32 4, %s22
      $region60: #{housing_nn_forward.1} parent=55 // pred_fallthru
        _
    $region56: #{housing_nn_forward.1} parent=5 // pred_fallthru
      _
    %p1105 = scmp.le.s32.totalorder 2, %s17
    // Predicated region
    $region61: #{housing_nn_forward.1} parent=5 // pred_check
      %p1106 = pneg %p1105
    $region62: #{housing_nn_forward.1} parent=5 // pred_check_branch
      %1108 = sbr.rel (%p1106) target = $region64
    $region63: #{housing_nn_forward.1} parent=5 // pred_region
      %s1109 = ssub.s32 %s17, 2
      // Predicated region
      $region65: #{housing_nn_forward.1} parent=63 // pred_check
        %p1110 = pneg %p240
      $region66: #{housing_nn_forward.1} parent=63 // pred_check_branch
        %1112 = sbr.rel (%p1110) target = $region68
      $region67: #{housing_nn_forward.1} parent=63 // pred_region
        %s1113 = smul.u32 4, %s23
        %p1114 = scmp.lt.s32.totalorder %s1113, 7
        %s1115 = scalar_select %p1114, %s1113, 7
        %s1116 = scalar_lea.vmem %s9, %s1115
      $region68: #{housing_nn_forward.1} parent=63 // pred_fallthru
        _
    $region64: #{housing_nn_forward.1} parent=5 // pred_fallthru
      _
  $region6: #{housing_nn_forward.1} parent=0 // loop_footer
    %s21 = sadd.s32 1, %s17
  $region7: #{housing_nn_forward.1} parent=0 // loop_footer_branch
    %16 = sbr.rel target = $region3
  $region8: #{housing_nn_forward.1} parent=0 // loop_exit
    _

</llo_original>
